<compile_context>
chip_gen: v5e
topology: v5e:2x2
jax: 0.10.0
libtpu: 0.0.40
codegen_flags: <defaults>
</compile_context>

<pallas_src>
import functools

import numpy as np
import jax
import jax.numpy as jnp
from jax import lax
from jax.experimental import pallas as pl
from jax.experimental.pallas import tpu as pltpu


# ----------------------------------------------------------------------------
# Static sizing helpers
# ----------------------------------------------------------------------------
_VMEM_INPUT_BUDGET = 16 * 1024 * 1024    # actual (lane-padded) bytes for the 2 input buffers
_VMEM_LIMIT = 48 * 1024 * 1024           # <= v7x 64 MiB physical; > v5e's 16 MiB scoped default


def _round_up(x, m):
    return -(-x // m) * m


def _sublane_multiple(itemsize):
    # sub-32-bit dtypes pack along sublanes: 8 rows/vreg @32b, 16 @16b, 32 @8b
    return {4: 8, 2: 16, 1: 32}.get(int(itemsize), 8)


# ----------------------------------------------------------------------------
# Path U: uniform graph sizes (min == max).  The flat input IS the dense
# (bsz, max_size, dim) batch, so we use plain BlockSpec auto-pipelining with
# large batch tiles and an optional node-chunk reduction axis.
# ----------------------------------------------------------------------------
def _mean_uniform_kernel(x_ref, o_ref, acc_ref, *, inv_n, tn, max_size, single):
    c = pl.program_id(1)
    x = x_ref[...].astype(jnp.float32)                         # (tb, tn, dim)
    if max_size % tn != 0:          # static: mask node rows past the true extent
        rows = c * tn + lax.broadcasted_iota(jnp.int32, x.shape, 1)
        x = jnp.where(rows < max_size, x, 0.0)
    part = jnp.sum(x, axis=1)                                  # (tb, dim) f32

    if single:                      # one node chunk: skip the accumulator round-trip
        o_ref[...] = (part * inv_n).astype(o_ref.dtype)
    else:
        @pl.when(c == 0)
        def _():
            acc_ref[...] = jnp.zeros_like(acc_ref)

        acc_ref[...] += part

        @pl.when(c == pl.num_programs(1) - 1)
        def _():
            o_ref[...] = (acc_ref[...] * inv_n).astype(o_ref.dtype)


def _uniform_tiles(bsz, max_size, dim, itemsize, budget):
    sub = _sublane_multiple(itemsize)
    lane_dim = _round_up(dim, 128)                 # honest (8,128)-tiled footprint
    half = max(budget // 2, 1)                     # one of the two pipeline buffers
    per_graph = _round_up(max_size, sub) * lane_dim * itemsize
    ref_tb = min(8, bsz)

    if ref_tb * per_graph <= half:                 # whole node axis fits per graph
        tn = max_size
    else:                                          # chunk the node axis
        tn = (half // (max(ref_tb, 1) * lane_dim * itemsize)) // sub * sub
        tn = int(min(max(tn, sub), _round_up(max_size, sub)))
    nc = -(-max_size // tn)

    if bsz <= 8:
        tb = bsz                                   # full-extent batch block, no edges
    else:
        per_blk_graph = _round_up(tn, sub) * lane_dim * itemsize
        tb = max(8, (half // per_blk_graph) // 8 * 8)   # no artificial 128 cap
        tb = min(tb, _round_up(bsz, 8))
        if bsz <= tb:                              # keep >= 2 batch blocks (v7x megacore)
            tb = max(8, _round_up(-(-bsz // 2), 8))
    return tb, tn, nc


def _mean_uniform(x3, budget):
    bsz, max_size, dim = (int(d) for d in x3.shape)
    itemsize = jnp.dtype(x3.dtype).itemsize
    tb, tn, nc = _uniform_tiles(bsz, max_size, dim, itemsize, budget)
    n_groups = -(-bsz // tb)
    bsz_p = n_groups * tb                          # only the (tiny) output is padded

    out = pl.pallas_call(
        functools.partial(_mean_uniform_kernel, inv_n=1.0 / max_size,
                          tn=tn, max_size=max_size, single=(nc == 1)),
        out_shape=jax.ShapeDtypeStruct((bsz_p, dim), x3.dtype),
        grid_spec=pltpu.PrefetchScalarGridSpec(
            num_scalar_prefetch=0,
            grid=(n_groups, nc),
            in_specs=[pl.BlockSpec((tb, tn, dim), lambda i, c: (i, c, 0))],
            out_specs=pl.BlockSpec((tb, dim), lambda i, c: (i, 0)),
            scratch_shapes=[pltpu.VMEM((tb, dim), jnp.float32)],
        ),
        compiler_params=pltpu.CompilerParams(
            dimension_semantics=("parallel", "arbitrary"),
            vmem_limit_bytes=_VMEM_LIMIT,
        ),
    )(x3)
    return out[:bsz]


# ----------------------------------------------------------------------------
# Path R: ragged graph sizes.  One grid step per (graph, node-chunk); each
# graph's contiguous rows are pulled straight out of graph_embedding with a
# manually double-buffered DMA (window clamped in-bounds, rows masked by the
# prefetched [lo, hi) range) and summed into an f32 group accumulator.
# ----------------------------------------------------------------------------
def _mean_ragged_kernel(start_ref, lo_ref, hi_ref, x_hbm, o_ref,
                        buf, sem, acc_ref, *, inv_n, tn, nc, tb):
    i = pl.program_id(0)                      # graph group
    j = pl.program_id(1)                      # graph within group
    c = pl.program_id(2)                      # node chunk within graph
    s = j * nc + c                            # step within this group
    n_steps = tb * nc                         # static

    def fetch(step, slot):
        jj = step // nc
        cc = step - jj * nc
        g = i * tb + jj
        row0 = start_ref[g] + cc * tn
        pltpu.make_async_copy(x_hbm.at[pl.ds(row0, tn)],
                              buf.at[slot], sem.at[slot]).start()

    # Group start: zero the accumulator and prime the pipeline.  Priming at the
    # group boundary keeps the "parallel" outer axis safe when v7x's two
    # TensorCores each take a slice of the groups.
    @pl.when(s == 0)
    def _():
        acc_ref[...] = jnp.zeros_like(acc_ref)
        fetch(0, 0)

    slot = s % 2

    # Prefetch the next chunk into the other slot before waiting (that slot's
    # previous DMA was already consumed on the previous step).
    @pl.when(s + 1 < n_steps)
    def _():
        fetch(s + 1, 1 - slot)

    # Scalar reads before the DMA wait (keeps SMEM store->load forwarding).
    g = i * tb + j
    lo = lo_ref[g]
    hi = hi_ref[g]

    pltpu.make_async_copy(x_hbm.at[pl.ds(0, tn)],
                          buf.at[slot], sem.at[slot]).wait()

    # Masked f32 sum of this chunk's rows that belong to graph g.
    xc = buf[slot].astype(jnp.float32)                          # (tn, dim)
    rows = c * tn + lax.broadcasted_iota(jnp.int32, xc.shape, 0)
    valid = (rows >= lo) & (rows < hi)
    csum = jnp.sum(jnp.where(valid, xc, 0.0), axis=0, keepdims=True)   # (1, dim)

    # Accumulate into row j of the group accumulator (select, no dynamic store).
    rowsel = lax.broadcasted_iota(jnp.int32, acc_ref.shape, 0) == j
    acc_ref[...] += jnp.where(rowsel, csum, 0.0)

    @pl.when(s == n_steps - 1)
    def _():
        o_ref[...] = (acc_ref[...] * inv_n).astype(o_ref.dtype)


def _mean_ragged(x, sizes, budget):
    total, dim = (int(d) for d in x.shape)
    bsz = int(sizes.shape[0])
    max_size = int(sizes.max())
    itemsize = jnp.dtype(x.dtype).itemsize
    sub = _sublane_multiple(itemsize)
    lane_dim = _round_up(dim, 128)

    # Node-chunk rows per DMA: fill half of the double-buffer budget, with
    # honest lane-padded accounting for narrow feature dims.
    tn = (max(budget, 2) // (2 * lane_dim * itemsize)) // sub * sub
    tn = int(min(max(tn, sub), _round_up(max_size, sub)))
    nc = -(-_round_up(max_size, sub) // tn)
    window = nc * tn                                  # rows DMA'd per graph

    # Keep every per-graph window inside the array: no O(total) padding copy.
    if total < window:
        x = jnp.pad(x, ((0, window - total), (0, 0)))
        total = window

    offsets = np.zeros(bsz, dtype=np.int64)
    offsets[1:] = np.cumsum(sizes)[:-1]
    starts = np.minimum(offsets, total - window)      # clamp window in-bounds
    lo = offsets - starts                             # first valid row in window
    hi = lo + sizes                                   # one past last valid row

    tb = bsz if bsz <= 8 else 8                       # 8 graphs per output block
    n_groups = -(-bsz // tb)
    bsz_p = n_groups * tb
    pad = bsz_p - bsz
    if pad:                                           # zero-length dummy graphs
        starts = np.concatenate([starts, np.zeros(pad, np.int64)])
        lo = np.concatenate([lo, np.zeros(pad, np.int64)])
        hi = np.concatenate([hi, np.zeros(pad, np.int64)])

    out = pl.pallas_call(
        functools.partial(_mean_ragged_kernel, inv_n=1.0 / max_size,
                          tn=tn, nc=nc, tb=tb),
        out_shape=jax.ShapeDtypeStruct((bsz_p, dim), x.dtype),
        grid_spec=pltpu.PrefetchScalarGridSpec(
            num_scalar_prefetch=3,
            grid=(n_groups, tb, nc),
            in_specs=[pl.BlockSpec(memory_space=pl.ANY)],
            out_specs=pl.BlockSpec((tb, dim), lambda i, j, c, *_: (i, 0)),
            scratch_shapes=[
                pltpu.VMEM((2, tn, dim), x.dtype),        # double-buffered node chunks
                pltpu.SemaphoreType.DMA((2,)),
                pltpu.VMEM((tb, dim), jnp.float32),       # per-group f32 accumulator
            ],
        ),
        compiler_params=pltpu.CompilerParams(
            dimension_semantics=("parallel", "arbitrary", "arbitrary"),
            vmem_limit_bytes=_VMEM_LIMIT,
        ),
    )(jnp.asarray(starts, jnp.int32), jnp.asarray(lo, jnp.int32),
      jnp.asarray(hi, jnp.int32), x)
    return out[:bsz]


# ----------------------------------------------------------------------------
# Public entry point + module wrapper
# ----------------------------------------------------------------------------
def graph_prompt_mean(graph_embedding, graph_len, *,
                      vmem_input_budget=_VMEM_INPUT_BUDGET):
    """out[b] = sum(rows of graph b) / max(graph_len).  Matches the PyTorch
    reference exactly (denominator is max_size; padding zeros count)."""
    sizes = np.asarray(graph_len).reshape(-1).astype(np.int64)
    bsz = int(sizes.shape[0])
    max_size = int(sizes.max())
    x = jnp.asarray(graph_embedding)
    # TODO(synk): extremely large feature dims (block bytes > VMEM even at the
    # minimal tile) would need a feature-axis split; not implemented here.
    if int(sizes.min()) == max_size:
        # uniform sizes: the flat input IS the dense batch (free reshape, no scatter)
        return _mean_uniform(x.reshape(bsz, max_size, -1), vmem_input_budget)
    return _mean_ragged(x, sizes, vmem_input_budget)


class GraphPromptLayerMean:
    """JAX/Pallas port of graph_prompt_layer_mean.  The (2,2) weight Parameter
    of the PyTorch module is never used in forward; kept only for parity."""

    def __init__(self):
        self.weight = jnp.zeros((2, 2), jnp.float32)

    def __call__(self, graph_embedding, graph_len):
        return graph_prompt_mean(graph_embedding, graph_len)


# ----------------------------------------------------------------------------
# Pure reference (PyTorch semantics) for validation
# ----------------------------------------------------------------------------
def _ref_mean(graph_embedding, graph_len):
    sizes = np.asarray(graph_len).reshape(-1)
    max_size = int(sizes.max())
    x = np.asarray(graph_embedding, dtype=np.float32)
    outs, off = [], 0
    for l in sizes.tolist():
        outs.append(x[off:off + int(l)].sum(axis=0) / max_size)
        off += int(l)
    return np.stack(outs, axis=0).astype(np.asarray(graph_embedding).dtype)


if __name__ == "__main__":
    mod = GraphPromptLayerMean()
    key = jax.random.PRNGKey(0)
    k1, k2, k3, k4 = jax.random.split(key, 4)

    # 1) uniform batch (min == max): reshape + BlockSpec-pipelined path
    len1 = np.array([8, 8], dtype=np.int64)
    x1 = jax.random.normal(k1, (int(len1.sum()), 32), jnp.float32)
    o1 = jax.block_until_ready(mod(x1, len1))
    np.testing.assert_allclose(np.asarray(o1), _ref_mean(x1, len1),
                               rtol=1e-5, atol=1e-5)
    assert o1.shape == (2, 32)

    # 2) ragged batch: direct windowed-DMA path (single node chunk per graph)
    len2 = np.array([3, 8, 8, 5, 7], dtype=np.int64)
    x2 = jax.random.normal(k2, (int(len2.sum()), 32), jnp.float32)
    o2 = jax.block_until_ready(mod(x2, len2))
    np.testing.assert_allclose(np.asarray(o2), _ref_mean(x2, len2),
                               rtol=1e-5, atol=1e-5)
    assert o2.shape == (5, 32)

    # 3) ragged batch with a tiny budget: forces multi-chunk double-buffered DMAs
    len3 = np.array([20, 13, 27], dtype=np.int64)
    x3 = jax.random.normal(k3, (int(len3.sum()), 32), jnp.float32)
    o3 = jax.block_until_ready(graph_prompt_mean(x3, len3, vmem_input_budget=4096))
    np.testing.assert_allclose(np.asarray(o3), _ref_mean(x3, len3),
                               rtol=1e-5, atol=1e-5)
    assert o3.shape == (3, 32)

    # 4) uniform batch with a tiny budget: node-axis chunking + static tail mask
    len4 = np.array([13, 13, 13], dtype=np.int64)
    x4 = jax.random.normal(k4, (int(len4.sum()), 32), jnp.float32)
    o4 = jax.block_until_ready(graph_prompt_mean(x4, len4, vmem_input_budget=4096))
    np.testing.assert_allclose(np.asarray(o4), _ref_mean(x4, len4),
                               rtol=1e-5, atol=1e-5)
    assert o4.shape == (3, 32)

    print("KERNEL_OK")
</pallas_src>

<mosaic_0001>
module attributes {stable_mosaic.version = 11 : i64} {
  func.func @_mean_uniform_kernel(%arg0: i32, %arg1: i32, %arg2: memref<2x8x32xf32, #tpu.memory_space<vmem>>, %arg3: memref<2x32xf32, #tpu.memory_space<vmem>>, %arg4: memref<2x32xf32, #tpu.memory_space<vmem>>) attributes {dimension_semantics = [#tpu.dimension_semantics<parallel>, #tpu.dimension_semantics<arbitrary>], iteration_bounds = array<i64: 1, 1>, scalar_prefetch = 0 : i64, scratch_operands = 1 : i64, tpu.core_type = #tpu.core_type<tc>, window_params = [{transform_indices = @transform_0, window_bounds = array<i64: 2, 8, 32>}, {transform_indices = @transform_1, window_bounds = array<i64: 2, 32>}]} {
    %c0 = arith.constant 0 : index
    %c0_0 = arith.constant 0 : index
    %c0_1 = arith.constant 0 : index
    %0 = vector.load %arg2[%c0, %c0_0, %c0_1] : memref<2x8x32xf32, #tpu.memory_space<vmem>>, vector<2x8x32xf32>
    %cst = arith.constant dense<0.000000e+00> : vector<2x32xf32>
    %1 = vector.multi_reduction <add>, %0, %cst [1] : vector<2x8x32xf32> to vector<2x32xf32>
    %cst_2 = arith.constant 1.250000e-01 : f32
    %2 = vector.broadcast %cst_2 : f32 to vector<2x32xf32>
    %3 = arith.mulf %1, %2 : vector<2x32xf32>
    %c0_3 = arith.constant 0 : index
    %c0_4 = arith.constant 0 : index
    %4 = vector.load %arg3[%c0_3, %c0_4] : memref<2x32xf32, #tpu.memory_space<vmem>>, vector<2x32xf32>
    tpu.vector_store %arg3[%c0_3, %c0_4], %3 {strides = array<i32>} : memref<2x32xf32, #tpu.memory_space<vmem>>, vector<2x32xf32>,
    return
  }
  func.func @transform_0(%arg0: i32, %arg1: i32) -> (i32, i32, i32) {
    %c0_i32 = arith.constant 0 : i32
    %c0_i32_0 = arith.constant 0 : i32
    return %arg0, %arg1, %c0_i32 : i32, i32, i32
  }
  func.func @transform_1(%arg0: i32, %arg1: i32) -> (i32, i32) {
    %c0_i32 = arith.constant 0 : i32
    %c0_i32_0 = arith.constant 0 : i32
    return %arg0, %c0_i32 : i32, i32
  }
}

</mosaic_0001>

<llo_original>
// kernel: tpu_custom_call.1
$region0: #{tpu_custom_call.1}
  #allocation0 [shape = 'u32[]', space=smem, size = 0x4, offset = 0x4, fixed_abs, tag = 'smem constant byte address 0x4 - core index']
  #allocation1 [shape = 'u32[72,128]{1,0:T(1,128)}', space=vmem, size = 0x9000, scoped, tag = 'internal scratch']
  #allocation2 [shape = 'f32[2,32]{1,0:T(2,128)}', space=vmem, size = 0x400, scoped, tag = 'scratch operand']
  %s0 = inlined_call_operand.hbm [shape: f32[2,8,32], index: 0, kind: input, shape index: {}]
  %s1 = inlined_call_operand.hbm [shape: f32[2,32], index: 1, kind: output, shape index: {}]
  %s2 = sld [smem:[#allocation0]]
  $region18: #{tpu_custom_call.1} parent=0
    _
  %s4 = ssub.s32 1, %s2
  %s5 = scalar_select 0, %s4, %s2
  $region1: #{tpu_custom_call.1} parent=0
    #allocation3 [shape = 'u8[8192]{0}', space=vmem, size = 0x2000, scoped, tag = 'input window, operand 0, single buffered']
    #allocation4 [shape = 's32[1]{0}', space=sflag, size = 0x4, scoped, tag = 'scoped memory for tpu_custom_call.1']
    #allocation5 [shape = 's32[1]{0}', space=sflag, size = 0x4, scoped, tag = 'scoped memory for tpu_custom_call.1']
    #allocation6 [shape = 'u8[1024]{0}', space=vmem, size = 0x400, scoped, tag = 'output window, operand 0, single buffered']
    %6 = vsyncpa [#allocation4], 0
    %7 = vsyncpa [#allocation5], 0
    // Predicated region
    $region2: #{tpu_custom_call.1} parent=1 // pred_check
      _
    $region3: #{tpu_custom_call.1} parent=1 // pred_check_branch
      %9 = sbr.rel (0) target = $region5
    $region4: #{tpu_custom_call.1} parent=1 // pred_region
      %11 = vsyncadd [#allocation4], 0
      %s12 = sshll.u32 %s0, 4
      %s13 = int_to_ptr.hbm [resolvable:$true] %s12
      %s14 = sshll.u32 [#allocation3], 4
      %s15 = int_to_ptr.vmem [resolvable:$true] %s14
      %20 = dma.hbm_to_vmem [thread:$0]  %s13, 256, %s15, [#allocation4], 128, 128, 8
    $region5: #{tpu_custom_call.1} parent=1 // pred_fallthru
      _
    // Predicated region
    $region6: #{tpu_custom_call.1} parent=1 // pred_check
      _
    $region7: #{tpu_custom_call.1} parent=1 // pred_check_branch
      %22 = sbr.rel (0) target = $region9
    $region8: #{tpu_custom_call.1} parent=1 // pred_region
      %24 = dma.done [#allocation4], 256
    $region9: #{tpu_custom_call.1} parent=1 // pred_fallthru
      _
    %v25 = vld [vmem:[#allocation3] sm:$0xff]
    %v26 = vld [vmem:[#allocation3 + $0x8] sm:$0xff]
    %vm27 = vcmask 261120
    %v28 = vsel %vm27, %v25, 0.0
    %v29 = vrot.slane %v28, 4
    %v30 = vadd.f32 %v28, %v29
    %v31 = vrot.slane %v30, 2
    %v32 = vadd.f32 %v30, %v31
    %v33 = vrot.slane %v32, 1
    %v34 = vadd.f32 %v32, %v33
    %v35 = vsel %vm27, %v26, 0.0
    %v36 = vrot.slane %v35, 4
    %v37 = vadd.f32 %v35, %v36
    %v38 = vrot.slane %v37, 2
    %v39 = vadd.f32 %v37, %v38
    %v40 = vrot.slane %v39, 1
    %v41 = vadd.f32 %v39, %v40
    %v42 = vmul.f32 %v34, 0.125
    %v43 = vmul.f32 %v41, 0.125
    %vm46 = vcmask 1041409
    %v47 = vsel %vm46, %v43, %v42
    %vm49 = vcmask 254976
    %50 = vst.msk [vmem:[#allocation6] sm:$0x3] %vm49, %v47
    // Predicated region
    $region10: #{tpu_custom_call.1} parent=1 // pred_check
      _
    $region11: #{tpu_custom_call.1} parent=1 // pred_check_branch
      %52 = sbr.rel (0) target = $region13
    $region12: #{tpu_custom_call.1} parent=1 // pred_region
      %54 = vsyncadd [#allocation5], 0
      %s56 = sshll.u32 [#allocation6], 4
      %s57 = int_to_ptr.vmem [resolvable:$true] %s56
      %s58 = sshll.u32 %s1, 4
      %s59 = int_to_ptr.hbm [resolvable:$true] %s58
      %61 = dma.vmem_to_hbm [thread:$0]  %s57, 32, %s59, [#allocation5]
    $region13: #{tpu_custom_call.1} parent=1 // pred_fallthru
      _
    // Predicated region
    $region14: #{tpu_custom_call.1} parent=1 // pred_check
      _
    $region15: #{tpu_custom_call.1} parent=1 // pred_check_branch
      %63 = sbr.rel (0) target = $region17
    $region16: #{tpu_custom_call.1} parent=1 // pred_region
      %65 = dma.done [#allocation5], 32
    $region17: #{tpu_custom_call.1} parent=1 // pred_fallthru
      _
    %66 = vsyncpa [#allocation4], 1
    %67 = vsyncpa [#allocation5], 1

</llo_original>
